<compile_context>
chip_gen: v6e
topology: v6e:2x2x1
jax: 0.10.0
libtpu: 0.0.40
codegen_flags: <defaults>
</compile_context>

<pallas_src>
import functools

import jax
import jax.numpy as jnp
from jax.experimental import pallas as pl
from jax.experimental.pallas import tpu as pltpu

IGNORE_INDEX = -100

_LIVE_F32_TEMPS = 5                               # live (rows, v_tile) f32 temps in the body
_NEG_INIT = float(jnp.finfo(jnp.float32).min)     # running-max init
_MASK_VALUE = -1e30                               # value for out-of-bounds vocab columns


def _round_up(x, m):
    return ((x + m - 1) // m) * m


def _choose_tiles(n_rows, vocab, it_t, it_s):
    """Generation-aware (row_tile, v_tile, vmem_limit_bytes)."""
    try:
        vmem_cap = int(pltpu.get_tpu_info().vmem_capacity_bytes)
    except Exception:
        vmem_cap = 64 * 1024 * 1024               # conservative fallback (v7x per-TC)
    block_budget = (vmem_cap * 3) // 5            # blocks + live f32 temporaries
    vmem_limit = min((vmem_cap * 3) // 4, 100 * 1024 * 1024)

    granule = 16 if min(it_t, it_s) < 4 else 8    # bf16 packs 16 rows per vreg
    # 2 inputs x 2 pipeline buffers (each in its own dtype) + live f32 temps.
    per_elem = 2 * (it_t + it_s) + _LIVE_F32_TEMPS * 4

    # Row-tile cap: don't over-pad tiny inputs; keep >= 2 row blocks so both v7x
    # TensorCores get work (harmless on single-TC v5e/v6e); cap vreg pressure.
    if n_rows <= granule:
        row_cap = max(n_rows, 1)
    else:
        row_cap = min(512, max(granule, _round_up(pl.cdiv(n_rows, 2), granule)))

    rows_fit = block_budget // (vocab * per_elem)  # full-vocab rows that fit the budget
    if rows_fit >= granule or rows_fit >= n_rows:
        v_tile = vocab                             # single V chunk per row block
        row_tile = min(row_cap, max(granule, (rows_fit // granule) * granule))
    else:
        # V-tiled online-softmax path (LLM-scale vocab; avoids v7x VMEM cliff).
        row_tile = row_cap if n_rows <= granule else min(row_cap, 256)
        v_tile = (block_budget // (max(row_tile, 1) * per_elem)) // 128 * 128
        v_tile = max(128, min(v_tile, _round_up(vocab, 128)))
    return max(row_tile, 1), v_tile, vmem_limit


def _kd_loss_kernel(t_ref, s_ref, x_ref, m_t, z_t, num, m_s, z_s, *,
                    vocab, v_tile, need_v_mask):
    v_idx = pl.program_id(1)

    @pl.when(v_idx == 0)
    def _():
        m_t[...] = jnp.full(m_t.shape, _NEG_INIT, jnp.float32)
        m_s[...] = jnp.full(m_s.shape, _NEG_INIT, jnp.float32)
        z_t[...] = jnp.zeros_like(z_t)
        z_s[...] = jnp.zeros_like(z_s)
        num[...] = jnp.zeros_like(num)

    t_raw = t_ref[...]                       # original dtype (bf16-friendly)
    inf_mask = jnp.isinf(t_raw)              # mask on raw values, before the f32 cast
    t = t_raw.astype(jnp.float32)
    s = s_ref[...].astype(jnp.float32)

    if need_v_mask:                          # static: only when v_tile doesn't divide V
        col = jax.lax.broadcasted_iota(jnp.int32, t.shape, 1) + v_idx * v_tile
        valid = col < vocab
        t = jnp.where(valid, t, _MASK_VALUE)
        s = jnp.where(valid, s, _MASK_VALUE)
        inf_mask = jnp.logical_and(inf_mask, valid)

    # Teacher: online softmax partition function + fused (masked) numerator
    #   num = sum_v [~isinf(t_v)] * exp(t_v - m_t) * s_v
    m_t_old = m_t[...]
    m_t_new = jnp.maximum(m_t_old, jnp.max(t, axis=-1, keepdims=True))
    alpha_t = jnp.exp(m_t_old - m_t_new)
    t_exp = jnp.exp(t - m_t_new)
    z_t[...] = alpha_t * z_t[...] + jnp.sum(t_exp, axis=-1, keepdims=True)
    num[...] = alpha_t * num[...] + jnp.sum(
        jnp.where(inf_mask, 0.0, t_exp * s), axis=-1, keepdims=True)
    m_t[...] = m_t_new

    # Student: online log-sum-exp
    m_s_old = m_s[...]
    m_s_new = jnp.maximum(m_s_old, jnp.max(s, axis=-1, keepdims=True))
    alpha_s = jnp.exp(m_s_old - m_s_new)
    z_s[...] = alpha_s * z_s[...] + jnp.sum(jnp.exp(s - m_s_new),
                                            axis=-1, keepdims=True)
    m_s[...] = m_s_new

    @pl.when(v_idx == pl.num_programs(1) - 1)
    def _():
        # x = sum_v softmax(t)_v * log_softmax(s)_v  (isinf(teacher) zeroed)
        x_col = num[...] / z_t[...] - m_s[...] - jnp.log(z_s[...])     # (rows, 1)
        # Lane-dense store: relayout the (rows,1) column into a (1,rows) lane row
        # using only guaranteed-lowerable ops (2-D iota + select + sublane reduce);
        # runs once per row block, so its cost is negligible.
        rows = x_col.shape[0]
        rid = jax.lax.broadcasted_iota(jnp.int32, (rows, rows), 0)
        cid = jax.lax.broadcasted_iota(jnp.int32, (rows, rows), 1)
        x_row = jnp.sum(jnp.where(rid == cid, x_col, 0.0), axis=0, keepdims=True)
        x_ref[...] = x_row.reshape(x_ref.shape)


@functools.partial(jax.jit, static_argnames=("row_tile", "v_tile"))
def kd_loss(teacher_logits, student_logits, labels, row_tile=None, v_tile=None):
    """teacher_logits / student_logits: (..., V); labels: (...) int."""
    V = teacher_logits.shape[-1]
    t2 = teacher_logits.reshape(-1, V)
    s2 = student_logits.reshape(-1, V)
    N = t2.shape[0]
    it_t = jnp.dtype(t2.dtype).itemsize
    it_s = jnp.dtype(s2.dtype).itemsize

    rt, vt, vmem_limit = _choose_tiles(N, V, it_t, it_s)
    if row_tile is not None:
        rt = int(row_tile)
    if v_tile is not None:
        vt = int(v_tile)

    grid_rows = pl.cdiv(N, rt)      # last row block may over-run N: garbage rows dropped
    grid_v = pl.cdiv(V, vt)         # last V block masked in-kernel if vt doesn't divide V
    need_v_mask = (V % vt) != 0

    kernel = functools.partial(_kd_loss_kernel, vocab=V, v_tile=vt,
                               need_v_mask=need_v_mask)

    x_tiles = pl.pallas_call(
        kernel,
        out_shape=jax.ShapeDtypeStruct((grid_rows, 1, rt), jnp.float32),
        grid_spec=pltpu.PrefetchScalarGridSpec(
            num_scalar_prefetch=0,
            grid=(grid_rows, grid_v),
            in_specs=[
                pl.BlockSpec((rt, vt), lambda i, j: (i, j)),
                pl.BlockSpec((rt, vt), lambda i, j: (i, j)),
            ],
            out_specs=pl.BlockSpec((1, 1, rt), lambda i, j: (i, 0, 0)),
            scratch_shapes=[pltpu.VMEM((rt, 1), jnp.float32)] * 5,
        ),
        compiler_params=pltpu.CompilerParams(
            dimension_semantics=("parallel", "arbitrary"),
            vmem_limit_bytes=vmem_limit,
        ),
        cost_estimate=pl.CostEstimate(
            flops=12 * N * V,
            transcendentals=2 * N * V,
            bytes_accessed=N * V * (it_t + it_s) + 4 * N,
        ),
    )(t2, s2)

    x = x_tiles.reshape(-1)[:N]                  # drop over-run rows of the last block
    mask = (labels.reshape(-1) != IGNORE_INDEX).astype(jnp.float32)
    # TODO(synk): if every label equals IGNORE_INDEX this divides by zero (NaN),
    # matching the PyTorch reference behavior.
    return -jnp.sum(x * mask) / jnp.sum(mask)


def _kd_loss_ref(teacher_logits, student_logits, labels):
    # pure-JAX reference of the PyTorch forward
    t = teacher_logits.astype(jnp.float32)
    s = student_logits.astype(jnp.float32)
    teacher_probs = jax.nn.softmax(t, axis=-1)
    log_student = jax.nn.log_softmax(s, axis=-1)
    probs = teacher_probs * log_student
    probs = jnp.where(jnp.isinf(t), 0.0, probs)
    x = jnp.sum(probs, axis=-1).reshape(-1)
    mask = (labels.reshape(-1) != IGNORE_INDEX).astype(jnp.float32)
    return -jnp.sum(x * mask) / jnp.sum(mask)


if __name__ == "__main__":
    key = jax.random.PRNGKey(0)
    k1, k2, k3 = jax.random.split(key, 3)

    # Primary check: small LM-shaped logits (batch=2, seq=8, vocab=128).
    B, S, V = 2, 8, 128
    teacher_logits = jax.random.normal(k1, (B, S, V), dtype=jnp.float32)
    student_logits = jax.random.normal(k2, (B, S, V), dtype=jnp.float32)
    labels = jax.random.randint(k3, (B, S), 0, V, dtype=jnp.int32)
    labels = labels.at[0, 0].set(IGNORE_INDEX).at[1, 3].set(IGNORE_INDEX)
    # Exercise the isinf(teacher) masking path.
    teacher_logits = teacher_logits.at[0, 1, 7].set(-jnp.inf)
    teacher_logits = teacher_logits.at[1, 2, 33].set(-jnp.inf)

    loss = kd_loss(teacher_logits, student_logits, labels)
    jax.block_until_ready(loss)
    ref = _kd_loss_ref(teacher_logits, student_logits, labels)
    assert jnp.allclose(loss, ref, rtol=1e-5, atol=1e-5), (loss, ref)

    # Secondary check: ragged rows (N=15, not a multiple of the row tile) and a
    # forced V-tiled online pass with a masked vocab tail (200 % 128 != 0).
    B2, S2, V2 = 3, 5, 200
    t_b = jax.random.normal(k1, (B2, S2, V2), dtype=jnp.float32)
    s_b = jax.random.normal(k2, (B2, S2, V2), dtype=jnp.float32)
    l_b = jax.random.randint(k3, (B2, S2), 0, V2, dtype=jnp.int32)
    l_b = l_b.at[2, 4].set(IGNORE_INDEX)
    loss2 = kd_loss(t_b, s_b, l_b, row_tile=8, v_tile=128)
    jax.block_until_ready(loss2)
    ref2 = _kd_loss_ref(t_b, s_b, l_b)
    assert jnp.allclose(loss2, ref2, rtol=1e-5, atol=1e-5), (loss2, ref2)

    print("KERNEL_OK")
</pallas_src>

<mosaic_0001>
module attributes {stable_mosaic.version = 11 : i64} {
  func.func @_kd_loss_kernel(%arg0: i32, %arg1: i32, %arg2: memref<8x128xf32, #tpu.memory_space<vmem>>, %arg3: memref<8x128xf32, #tpu.memory_space<vmem>>, %arg4: memref<1x1x8xf32, #tpu.memory_space<vmem>>, %arg5: memref<8x1xf32, #tpu.memory_space<vmem>>, %arg6: memref<8x1xf32, #tpu.memory_space<vmem>>, %arg7: memref<8x1xf32, #tpu.memory_space<vmem>>, %arg8: memref<8x1xf32, #tpu.memory_space<vmem>>, %arg9: memref<8x1xf32, #tpu.memory_space<vmem>>) attributes {dimension_semantics = [#tpu.dimension_semantics<parallel>, #tpu.dimension_semantics<arbitrary>], iteration_bounds = array<i64: 2, 1>, scalar_prefetch = 0 : i64, scratch_operands = 5 : i64, tpu.core_type = #tpu.core_type<tc>, window_params = [{transform_indices = @transform_0, window_bounds = array<i64: 8, 128>}, {transform_indices = @transform_1, window_bounds = array<i64: 8, 128>}, {transform_indices = @transform_2, window_bounds = array<i64: 1, 1, 8>}]} {
    %c0_i32 = arith.constant 0 : i32
    %0 = arith.cmpi eq, %arg1, %c0_i32 : i32
    %1 = arith.extui %0 : i1 to i32
    %c0_i32_0 = arith.constant 0 : i32
    %2 = arith.cmpi ne, %1, %c0_i32_0 : i32
    scf.if %2 {
      %cst_32 = arith.constant -3.40282347E+38 : f32
      %52 = vector.broadcast %cst_32 : f32 to vector<8x1xf32>
      %c0_33 = arith.constant 0 : index
      %c0_34 = arith.constant 0 : index
      %53 = vector.load %arg5[%c0_33, %c0_34] : memref<8x1xf32, #tpu.memory_space<vmem>>, vector<8x1xf32>
      tpu.vector_store %arg5[%c0_33, %c0_34], %52 {strides = array<i32>} : memref<8x1xf32, #tpu.memory_space<vmem>>, vector<8x1xf32>,
      %cst_35 = arith.constant -3.40282347E+38 : f32
      %54 = vector.broadcast %cst_35 : f32 to vector<8x1xf32>
      %c0_36 = arith.constant 0 : index
      %c0_37 = arith.constant 0 : index
      %55 = vector.load %arg8[%c0_36, %c0_37] : memref<8x1xf32, #tpu.memory_space<vmem>>, vector<8x1xf32>
      tpu.vector_store %arg8[%c0_36, %c0_37], %54 {strides = array<i32>} : memref<8x1xf32, #tpu.memory_space<vmem>>, vector<8x1xf32>,
      %cst_38 = arith.constant 0.000000e+00 : f32
      %56 = vector.broadcast %cst_38 : f32 to vector<8x1xf32>
      %c0_39 = arith.constant 0 : index
      %c0_40 = arith.constant 0 : index
      %57 = vector.load %arg6[%c0_39, %c0_40] : memref<8x1xf32, #tpu.memory_space<vmem>>, vector<8x1xf32>
      tpu.vector_store %arg6[%c0_39, %c0_40], %56 {strides = array<i32>} : memref<8x1xf32, #tpu.memory_space<vmem>>, vector<8x1xf32>,
      %cst_41 = arith.constant 0.000000e+00 : f32
      %58 = vector.broadcast %cst_41 : f32 to vector<8x1xf32>
      %c0_42 = arith.constant 0 : index
      %c0_43 = arith.constant 0 : index
      %59 = vector.load %arg9[%c0_42, %c0_43] : memref<8x1xf32, #tpu.memory_space<vmem>>, vector<8x1xf32>
      tpu.vector_store %arg9[%c0_42, %c0_43], %58 {strides = array<i32>} : memref<8x1xf32, #tpu.memory_space<vmem>>, vector<8x1xf32>,
      %cst_44 = arith.constant 0.000000e+00 : f32
      %60 = vector.broadcast %cst_44 : f32 to vector<8x1xf32>
      %c0_45 = arith.constant 0 : index
      %c0_46 = arith.constant 0 : index
      %61 = vector.load %arg7[%c0_45, %c0_46] : memref<8x1xf32, #tpu.memory_space<vmem>>, vector<8x1xf32>
      tpu.vector_store %arg7[%c0_45, %c0_46], %60 {strides = array<i32>} : memref<8x1xf32, #tpu.memory_space<vmem>>, vector<8x1xf32>,
    } else {
    }
    %c0 = arith.constant 0 : index
    %c0_1 = arith.constant 0 : index
    %3 = vector.load %arg2[%c0, %c0_1] : memref<8x128xf32, #tpu.memory_space<vmem>>, vector<8x128xf32>
    %4 = math.absf %3 : vector<8x128xf32>
    %cst = arith.constant 0x7F800000 : f32
    %5 = vector.broadcast %cst : f32 to vector<8x128xf32>
    %6 = arith.cmpf oeq, %4, %5 : vector<8x128xf32>
    %c0_2 = arith.constant 0 : index
    %c0_3 = arith.constant 0 : index
    %7 = vector.load %arg3[%c0_2, %c0_3] : memref<8x128xf32, #tpu.memory_space<vmem>>, vector<8x128xf32>
    %c0_4 = arith.constant 0 : index
    %c0_5 = arith.constant 0 : index
    %8 = vector.load %arg5[%c0_4, %c0_5] : memref<8x1xf32, #tpu.memory_space<vmem>>, vector<8x1xf32>
    %cst_6 = arith.constant dense<0xFF800000> : vector<8xf32>
    %9 = vector.multi_reduction <maximumf>, %3, %cst_6 [1] : vector<8x128xf32> to vector<8xf32>
    %10 = vector.shape_cast %9 : vector<8xf32> to vector<8x1xf32>
    %11 = arith.maximumf %8, %10 : vector<8x1xf32>
    %12 = arith.subf %8, %11 : vector<8x1xf32>
    %13 = math.exp %12 : vector<8x1xf32>
    %14 = vector.broadcast %11 : vector<8x1xf32> to vector<8x128xf32>
    %15 = arith.subf %3, %14 : vector<8x128xf32>
    %16 = math.exp %15 : vector<8x128xf32>
    %c0_7 = arith.constant 0 : index
    %c0_8 = arith.constant 0 : index
    %17 = vector.load %arg6[%c0_7, %c0_8] : memref<8x1xf32, #tpu.memory_space<vmem>>, vector<8x1xf32>
    %18 = arith.mulf %13, %17 : vector<8x1xf32>
    %cst_9 = arith.constant dense<0.000000e+00> : vector<8xf32>
    %19 = vector.multi_reduction <add>, %16, %cst_9 [1] : vector<8x128xf32> to vector<8xf32>
    %20 = vector.shape_cast %19 : vector<8xf32> to vector<8x1xf32>
    %21 = arith.addf %18, %20 : vector<8x1xf32>
    %c0_10 = arith.constant 0 : index
    %c0_11 = arith.constant 0 : index
    %22 = vector.load %arg6[%c0_10, %c0_11] : memref<8x1xf32, #tpu.memory_space<vmem>>, vector<8x1xf32>
    tpu.vector_store %arg6[%c0_10, %c0_11], %21 {strides = array<i32>} : memref<8x1xf32, #tpu.memory_space<vmem>>, vector<8x1xf32>,
    %c0_12 = arith.constant 0 : index
    %c0_13 = arith.constant 0 : index
    %23 = vector.load %arg7[%c0_12, %c0_13] : memref<8x1xf32, #tpu.memory_space<vmem>>, vector<8x1xf32>
    %24 = arith.mulf %13, %23 : vector<8x1xf32>
    %25 = arith.mulf %16, %7 : vector<8x128xf32>
    %cst_14 = arith.constant 0.000000e+00 : f32
    %26 = vector.broadcast %cst_14 : f32 to vector<8x128xf32>
    %27 = arith.select %6, %26, %25 : vector<8x128xi1>, vector<8x128xf32>
    %cst_15 = arith.constant dense<0.000000e+00> : vector<8xf32>
    %28 = vector.multi_reduction <add>, %27, %cst_15 [1] : vector<8x128xf32> to vector<8xf32>
    %29 = vector.shape_cast %28 : vector<8xf32> to vector<8x1xf32>
    %30 = arith.addf %24, %29 : vector<8x1xf32>
    %c0_16 = arith.constant 0 : index
    %c0_17 = arith.constant 0 : index
    %31 = vector.load %arg7[%c0_16, %c0_17] : memref<8x1xf32, #tpu.memory_space<vmem>>, vector<8x1xf32>
    tpu.vector_store %arg7[%c0_16, %c0_17], %30 {strides = array<i32>} : memref<8x1xf32, #tpu.memory_space<vmem>>, vector<8x1xf32>,
    %c0_18 = arith.constant 0 : index
    %c0_19 = arith.constant 0 : index
    %32 = vector.load %arg5[%c0_18, %c0_19] : memref<8x1xf32, #tpu.memory_space<vmem>>, vector<8x1xf32>
    tpu.vector_store %arg5[%c0_18, %c0_19], %11 {strides = array<i32>} : memref<8x1xf32, #tpu.memory_space<vmem>>, vector<8x1xf32>,
    %c0_20 = arith.constant 0 : index
    %c0_21 = arith.constant 0 : index
    %33 = vector.load %arg8[%c0_20, %c0_21] : memref<8x1xf32, #tpu.memory_space<vmem>>, vector<8x1xf32>
    %cst_22 = arith.constant dense<0xFF800000> : vector<8xf32>
    %34 = vector.multi_reduction <maximumf>, %7, %cst_22 [1] : vector<8x128xf32> to vector<8xf32>
    %35 = vector.shape_cast %34 : vector<8xf32> to vector<8x1xf32>
    %36 = arith.maximumf %33, %35 : vector<8x1xf32>
    %37 = arith.subf %33, %36 : vector<8x1xf32>
    %38 = math.exp %37 : vector<8x1xf32>
    %c0_23 = arith.constant 0 : index
    %c0_24 = arith.constant 0 : index
    %39 = vector.load %arg9[%c0_23, %c0_24] : memref<8x1xf32, #tpu.memory_space<vmem>>, vector<8x1xf32>
    %40 = arith.mulf %38, %39 : vector<8x1xf32>
    %41 = vector.broadcast %36 : vector<8x1xf32> to vector<8x128xf32>
    %42 = arith.subf %7, %41 : vector<8x128xf32>
    %43 = math.exp %42 : vector<8x128xf32>
    %cst_25 = arith.constant dense<0.000000e+00> : vector<8xf32>
    %44 = vector.multi_reduction <add>, %43, %cst_25 [1] : vector<8x128xf32> to vector<8xf32>
    %45 = vector.shape_cast %44 : vector<8xf32> to vector<8x1xf32>
    %46 = arith.addf %40, %45 : vector<8x1xf32>
    %c0_26 = arith.constant 0 : index
    %c0_27 = arith.constant 0 : index
    %47 = vector.load %arg9[%c0_26, %c0_27] : memref<8x1xf32, #tpu.memory_space<vmem>>, vector<8x1xf32>
    tpu.vector_store %arg9[%c0_26, %c0_27], %46 {strides = array<i32>} : memref<8x1xf32, #tpu.memory_space<vmem>>, vector<8x1xf32>,
    %c0_28 = arith.constant 0 : index
    %c0_29 = arith.constant 0 : index
    %48 = vector.load %arg8[%c0_28, %c0_29] : memref<8x1xf32, #tpu.memory_space<vmem>>, vector<8x1xf32>
    tpu.vector_store %arg8[%c0_28, %c0_29], %36 {strides = array<i32>} : memref<8x1xf32, #tpu.memory_space<vmem>>, vector<8x1xf32>,
    %c0_i32_30 = arith.constant 0 : i32
    %49 = arith.cmpi eq, %arg1, %c0_i32_30 : i32
    %50 = arith.extui %49 : i1 to i32
    %c0_i32_31 = arith.constant 0 : i32
    %51 = arith.cmpi ne, %50, %c0_i32_31 : i32
    scf.if %51 {
      %c0_32 = arith.constant 0 : index
      %c0_33 = arith.constant 0 : index
      %52 = vector.load %arg7[%c0_32, %c0_33] : memref<8x1xf32, #tpu.memory_space<vmem>>, vector<8x1xf32>
      %c0_34 = arith.constant 0 : index
      %c0_35 = arith.constant 0 : index
      %53 = vector.load %arg6[%c0_34, %c0_35] : memref<8x1xf32, #tpu.memory_space<vmem>>, vector<8x1xf32>
      %54 = arith.divf %52, %53 : vector<8x1xf32>
      %c0_36 = arith.constant 0 : index
      %c0_37 = arith.constant 0 : index
      %55 = vector.load %arg8[%c0_36, %c0_37] : memref<8x1xf32, #tpu.memory_space<vmem>>, vector<8x1xf32>
      %56 = arith.subf %54, %55 : vector<8x1xf32>
      %c0_38 = arith.constant 0 : index
      %c0_39 = arith.constant 0 : index
      %57 = vector.load %arg9[%c0_38, %c0_39] : memref<8x1xf32, #tpu.memory_space<vmem>>, vector<8x1xf32>
      %58 = math.log %57 : vector<8x1xf32>
      %59 = arith.subf %56, %58 : vector<8x1xf32>
      %60 = tpu.iota {dimensions = array<i32: 0>} : vector<8x8xi32>
      %61 = tpu.iota {dimensions = array<i32: 1>} : vector<8x8xi32>
      %62 = arith.cmpi eq, %60, %61 : vector<8x8xi32>
      %cst_40 = arith.constant 0.000000e+00 : f32
      %63 = vector.shape_cast %59 : vector<8x1xf32> to vector<8x1xf32>
      %64 = vector.broadcast %63 : vector<8x1xf32> to vector<8x8xf32>
      %65 = vector.broadcast %cst_40 : f32 to vector<8x8xf32>
      %66 = arith.select %62, %64, %65 : vector<8x8xi1>, vector<8x8xf32>
      %cst_41 = arith.constant dense<0.000000e+00> : vector<8xf32>
      %67 = vector.multi_reduction <add>, %66, %cst_41 [0] : vector<8x8xf32> to vector<8xf32>
      %68 = vector.shape_cast %67 : vector<8xf32> to vector<1x8xf32>
      %69 = vector.shape_cast %68 : vector<1x8xf32> to vector<1x1x8xf32>
      %c0_42 = arith.constant 0 : index
      %c0_43 = arith.constant 0 : index
      %c0_44 = arith.constant 0 : index
      %70 = vector.load %arg4[%c0_42, %c0_43, %c0_44] : memref<1x1x8xf32, #tpu.memory_space<vmem>>, vector<1x1x8xf32>
      tpu.vector_store %arg4[%c0_42, %c0_43, %c0_44], %69 {strides = array<i32>} : memref<1x1x8xf32, #tpu.memory_space<vmem>>, vector<1x1x8xf32>,
    } else {
    }
    return
  }
  func.func @transform_0(%arg0: i32, %arg1: i32) -> (i32, i32) {
    %c0_i32 = arith.constant 0 : i32
    return %arg0, %arg1 : i32, i32
  }
  func.func @transform_1(%arg0: i32, %arg1: i32) -> (i32, i32) {
    %c0_i32 = arith.constant 0 : i32
    return %arg0, %arg1 : i32, i32
  }
  func.func @transform_2(%arg0: i32, %arg1: i32) -> (i32, i32, i32) {
    %c0_i32 = arith.constant 0 : i32
    %c0_i32_0 = arith.constant 0 : i32
    %c0_i32_1 = arith.constant 0 : i32
    return %arg0, %c0_i32, %c0_i32_0 : i32, i32, i32
  }
}

</mosaic_0001>

<llo_original>
// kernel: kd_loss.1
$region0: #{kd_loss.1}
  #allocation0 [shape = 'u32[]', space=smem, size = 0x4, offset = 0x4, fixed_abs, tag = 'smem constant byte address 0x4 - core index']
  #allocation1 [shape = 'u32[144,128]{1,0:T(1,128)}', space=vmem, size = 0x12000, scoped, tag = 'internal scratch']
  #allocation2 [shape = 'f32[8,1]{1,0:T(8,128)}', space=vmem, size = 0x1000, scoped, tag = 'scratch operand']
  #allocation3 [shape = 'f32[8,1]{1,0:T(8,128)}', space=vmem, size = 0x1000, scoped, tag = 'scratch operand']
  #allocation4 [shape = 'f32[8,1]{1,0:T(8,128)}', space=vmem, size = 0x1000, scoped, tag = 'scratch operand']
  #allocation5 [shape = 'f32[8,1]{1,0:T(8,128)}', space=vmem, size = 0x1000, scoped, tag = 'scratch operand']
  #allocation6 [shape = 'f32[8,1]{1,0:T(8,128)}', space=vmem, size = 0x1000, scoped, tag = 'scratch operand']
  %s0 = inlined_call_operand.hbm [shape: f32[16,128], index: 0, kind: input, shape index: {}]
  %s1 = inlined_call_operand.hbm [shape: f32[16,128], index: 1, kind: input, shape index: {}]
  %s2 = inlined_call_operand.vmem [shape: f32[2,1,8], index: 2, kind: output, shape index: {}]
  %s3 = sld [smem:[#allocation0]]
  $region57: #{kd_loss.1} parent=0
    _
  %s5 = ssub.s32 1, %s3
  %s6 = scalar_select 0, %s5, %s3
  $region1: #{kd_loss.1} parent=0
    #allocation7 [shape = 'u8[8192]{0}', space=vmem, size = 0x2000, scoped, tag = 'input window, operand 0']
    #allocation8 [shape = 's32[2]{0}', space=sflag, size = 0x8, scoped, tag = 'scoped memory for kd_loss.1']
    #allocation9 [shape = 'u8[8192]{0}', space=vmem, size = 0x2000, scoped, tag = 'input window, operand 1']
    #allocation10 [shape = 's32[2]{0}', space=sflag, size = 0x8, scoped, tag = 'scoped memory for kd_loss.1']
    %7 = vsyncpa [#allocation8], 0
    %s8 = scalar_lea.sflag [#allocation8], 1
    %9 = vsyncpa %s8, 0
    %10 = vsyncpa [#allocation10], 0
    %s11 = scalar_lea.sflag [#allocation10], 1
    %12 = vsyncpa %s11, 0
    loop: start=0, step=1, limit=4
    $region2: #{kd_loss.1} parent=1 // loop_pre_header
      _
    $region3: #{kd_loss.1} parent=1 // loop_header
      %s14 = sphi 0, %s18
      %p15 = scmp.ge.s32.totalorder %s14, 4
      %s21 = sphi 0, %s33
      %s22 = sphi 0, %s29
      %s23 = sphi 0, %s21
      %s24 = sphi 0, %s22
      %s25 = sphi 0, %s23
      %s26 = sphi 0, %s24
      %s38 = sphi 0, %s40
      %s41 = sphi 0, %s38
      %s42 = sphi 0, %s41
      %s58 = sphi 0, %s42
      %s66 = sphi 0, %s68
      %s69 = sphi 0, %s66
      %s70 = sphi 0, %s69
      %s86 = sphi 0, %s70
      %s92 = sphi 0, %s94
      %s95 = sphi 0, %s92
      %s96 = sphi 0, %s95
      %s112 = sphi 0, %s96
    $region4: #{kd_loss.1} parent=1 // loop_header_branch
      %17 = sbr.rel (%p15) target = $region8
    $region5: #{kd_loss.1} parent=1 // loop_body
      %s19 = ssub.s32 %s14, 1
      %s20 = ssub.s32 %s14, 2
      %s27 = sadd.s32 1, %s22
      %p28 = scmp.ge.s32.totalorder %s27, 1
      %s29 = scalar_select %p28, 0, %s27
      %s30 = sadd.s32 1, %s21
      %s31 = scalar_select %p28, %s30, %s21
      %p32 = scmp.ge.s32.totalorder %s31, 2
      %s33 = scalar_select %p32, 0, %s31
      %s34 = ssub.s32 %s21, %s33
      %s35 = ssub.s32 %s22, %s29
      %s36 = sor.u32 %s34, %s35
      %p37 = scmp.eq.s32.totalorder %s36, 0
      %s39 = sadd.s32 %s38, 1
      %s40 = scalar_select %p37, %s38, %s39
      %p43 = pneg %p37
      %p44 = scmp.eq.s32.totalorder %s14, 1
      %p45 = por %p43, %p44
      %p46 = scmp.ne.s32.totalorder %s38, %s41
      %p47 = scmp.eq.s32.totalorder %s14, 0
      %p48 = por %p46, %p47
      %p49 = scmp.ne.s32.totalorder %s38, %s41
      %p50 = scmp.eq.s32.totalorder %s19, 1
      %p51 = por %p49, %p50
      %p52 = scmp.ne.s32.totalorder %s41, %s42
      %p53 = scmp.eq.s32.totalorder %s19, 0
      %p54 = por %p52, %p53
      %p55 = scmp.ne.s32.totalorder %s41, %s42
      %p56 = scmp.eq.s32.totalorder %s20, 1
      %p57 = por %p55, %p56
      %p59 = scmp.ne.s32.totalorder %s42, %s58
      %p60 = scmp.eq.s32.totalorder %s20, 0
      %p61 = por %p59, %p60
      %s62 = ssub.s32 %s21, %s33
      %s63 = ssub.s32 %s22, %s29
      %s64 = sor.u32 %s62, %s63
      %p65 = scmp.eq.s32.totalorder %s64, 0
      %s67 = sadd.s32 %s66, 1
      %s68 = scalar_select %p65, %s66, %s67
      %p71 = pneg %p65
      %p72 = scmp.eq.s32.totalorder %s14, 1
      %p73 = por %p71, %p72
      %p74 = scmp.ne.s32.totalorder %s66, %s69
      %p75 = scmp.eq.s32.totalorder %s14, 0
      %p76 = por %p74, %p75
      %p77 = scmp.ne.s32.totalorder %s66, %s69
      %p78 = scmp.eq.s32.totalorder %s19, 1
      %p79 = por %p77, %p78
      %p80 = scmp.ne.s32.totalorder %s69, %s70
      %p81 = scmp.eq.s32.totalorder %s19, 0
      %p82 = por %p80, %p81
      %p83 = scmp.ne.s32.totalorder %s69, %s70
      %p84 = scmp.eq.s32.totalorder %s20, 1
      %p85 = por %p83, %p84
      %p87 = scmp.ne.s32.totalorder %s70, %s86
      %p88 = scmp.eq.s32.totalorder %s20, 0
      %p89 = por %p87, %p88
      %s90 = ssub.s32 %s21, %s33
      %p91 = scmp.eq.s32.totalorder %s90, 0
      %s93 = sadd.s32 %s92, 1
      %s94 = scalar_select %p91, %s92, %s93
      %p97 = pneg %p91
      %p98 = scmp.eq.s32.totalorder %s14, 1
      %p99 = por %p97, %p98
      %p100 = scmp.ne.s32.totalorder %s92, %s95
      %p101 = scmp.eq.s32.totalorder %s14, 0
      %p102 = por %p100, %p101
      %p103 = scmp.ne.s32.totalorder %s92, %s95
      %p104 = scmp.eq.s32.totalorder %s19, 1
      %p105 = por %p103, %p104
      %p106 = scmp.ne.s32.totalorder %s95, %s96
      %p107 = scmp.eq.s32.totalorder %s19, 0
      %p108 = por %p106, %p107
      %p109 = scmp.ne.s32.totalorder %s95, %s96
      %p110 = scmp.eq.s32.totalorder %s20, 1
      %p111 = por %p109, %p110
      %p113 = scmp.ne.s32.totalorder %s96, %s112
      %p114 = scmp.eq.s32.totalorder %s20, 0
      %p115 = por %p113, %p114
      %p116 = scmp.le.s32.totalorder 1, %s14
      %p117 = scmp.lt.s32.totalorder %s14, 3
      %p118 = pnand %p116, %p117
      %p119 = pneg %p118
      // Predicated region
      $region9: #{kd_loss.1} parent=5 // pred_check
        _
      $region10: #{kd_loss.1} parent=5 // pred_check_branch
        %121 = sbr.rel (%p118) target = $region12
      $region11: #{kd_loss.1} parent=5 // pred_region
        %s122 = ssub.s32 %s14, 1
      $region12: #{kd_loss.1} parent=5 // pred_fallthru
        _
      %p123 = scmp.lt.s32.totalorder %s14, 2
      // Predicated region
      $region13: #{kd_loss.1} parent=5 // pred_check
        %p124 = pneg %p123
      $region14: #{kd_loss.1} parent=5 // pred_check_branch
        %126 = sbr.rel (%p124) target = $region16
      $region15: #{kd_loss.1} parent=5 // pred_region
        // Predicated region
        $region17: #{kd_loss.1} parent=15 // pred_check
          %p127 = pneg %p48
        $region18: #{kd_loss.1} parent=15 // pred_check_branch
          %129 = sbr.rel (%p127) target = $region20
        $region19: #{kd_loss.1} parent=15 // pred_region
          %s130 = sand.u32 %s38, 1
          %s131 = scalar_lea.sflag [#allocation8], %s130
          %s132 = sand.u32 %s38, 1
          %s133 = smul.addr %s132, 8
          %s134 = scalar_lea.vmem [#allocation7], %s133
          %s136 = ssub.s32 128, 128
          %137 = vsyncadd %s131, %s136
          %s138 = sadd.s32 %s22, %s21
          %s139 = smul.addr %s138, 128
          %s140 = scalar_lea.hbm %s0, %s139
          %s142 = sshll.u32 %s134, 4
          %s143 = int_to_ptr.vmem [resolvable:$true] %s142
          %145 = dma.hbm_to_vmem [thread:$0]  %s140, 128, %s143, %s131
        $region20: #{kd_loss.1} parent=15 // pred_fallthru
          _
        // Predicated region
        $region21: #{kd_loss.1} parent=15 // pred_check
          %p146 = pneg %p76
        $region22: #{kd_loss.1} parent=15 // pred_check_branch
          %148 = sbr.rel (%p146) target = $region24
        $region23: #{kd_loss.1} parent=15 // pred_region
          %s149 = sand.u32 %s66, 1
          %s150 = scalar_lea.sflag [#allocation10], %s149
          %s151 = sand.u32 %s66, 1
          %s152 = smul.addr %s151, 8
          %s153 = scalar_lea.vmem [#allocation9], %s152
          %s155 = ssub.s32 128, 128
          %156 = vsyncadd %s150, %s155
          %s157 = sadd.s32 %s22, %s21
          %s158 = smul.addr %s157, 128
          %s159 = scalar_lea.hbm %s1, %s158
          %s161 = sshll.u32 %s153, 4
          %s162 = int_to_ptr.vmem [resolvable:$true] %s161
          %164 = dma.hbm_to_vmem [thread:$0]  %s159, 128, %s162, %s150
        $region24: #{kd_loss.1} parent=15 // pred_fallthru
          _
      $region16: #{kd_loss.1} parent=5 // pred_fallthru
        _
      %p165 = scmp.le.s32.totalorder 1, %s14
      %p166 = scmp.lt.s32.totalorder %s14, 3
      %p167 = pnand %p165, %p166
      %p168 = pneg %p167
      // Predicated region
      $region25: #{kd_loss.1} parent=5 // pred_check
        _
      $region26: #{kd_loss.1} parent=5 // pred_check_branch
        %170 = sbr.rel (%p167) target = $region28
      $region27: #{kd_loss.1} parent=5 // pred_region
        %s171 = ssub.s32 %s14, 1
        %s172 = sand.u32 %s41, 1
        %s173 = scalar_lea.sflag [#allocation8], %s172
        %s174 = sand.u32 %s41, 1
        %s175 = smul.addr %s174, 8
        %s176 = scalar_lea.vmem [#allocation7], %s175
        // Predicated region
        $region29: #{kd_loss.1} parent=27 // pred_check
          %p177 = pneg %p54
        $region30: #{kd_loss.1} parent=27 // pred_check_branch
          %179 = sbr.rel (%p177) target = $region32
        $region31: #{kd_loss.1} parent=27 // pred_region
          %180 = dma.done %s173, 128
        $region32: #{kd_loss.1} parent=27 // pred_fallthru
          _
        %s181 = sand.u32 %s69, 1
        %s182 = scalar_lea.sflag [#allocation10], %s181
        %s183 = sand.u32 %s69, 1
        %s184 = smul.addr %s183, 8
        %s185 = scalar_lea.vmem [#allocation9], %s184
        // Predicated region
        $region33: #{kd_loss.1} parent=27 // pred_check
          %p186 = pneg %p82
        $region34: #{kd_loss.1} parent=27 // pred_check_branch
          %188 = sbr.rel (%p186) target = $region36
        $region35: #{kd_loss.1} parent=27 // pred_region
          %189 = dma.done %s182, 128
        $region36: #{kd_loss.1} parent=27 // pred_fallthru
          _
        %s190 = sand.u32 %s41, 1
        %s191 = scalar_lea.sflag [#allocation8], %s190
        %s192 = sand.u32 %s41, 1
        %s193 = smul.addr %s192, 8
        %s194 = scalar_lea.vmem [#allocation7], %s193
        %p195 = pneg %p54
        %p196 = pneg %p51
        %s197 = sand.u32 %s69, 1
        %s198 = scalar_lea.sflag [#allocation10], %s197
        %s199 = sand.u32 %s69, 1
        %s200 = smul.addr %s199, 8
        %s201 = scalar_lea.vmem [#allocation9], %s200
        %p202 = pneg %p82
        %p203 = pneg %p79
        %p204 = pneg %p108
        %p205 = pneg %p105
        %p206 = scmp.lt.s32.totalorder %s23, 1
        %s207 = scalar_select %p206, %s23, 1
        %s208 = scalar_lea.vmem %s2, %s207
        %p209 = scmp.lt.s32.totalorder %s23, 1
        %s210 = scalar_select %p209, %s23, 1
        %s211 = scalar_lea.vmem %s2, %s210
        %p212 = scmp.eq.s32.totalorder %s24, 0
        // Predicated region
        $region37: #{kd_loss.1} parent=27 // pred_check
          %p213 = pneg %p212
        $region38: #{kd_loss.1} parent=27 // pred_check_branch
          %215 = sbr.rel (%p213) target = $region40
        $region39: #{kd_loss.1} parent=27 // pred_region
          %vm216 = vcmask 7168
          %217 = vst.msk [vmem:[#allocation2] sm:$0xff] %vm216, -3.4028235e+38
          %218 = vst.msk [vmem:[#allocation5] sm:$0xff] %vm216, -3.4028235e+38
          %219 = vst.msk [vmem:[#allocation3] sm:$0xff] %vm216, 0.0
          %220 = vst.msk [vmem:[#allocation6] sm:$0xff] %vm216, 0.0
          %221 = vst.msk [vmem:[#allocation4] sm:$0xff] %vm216, 0.0
        $region40: #{kd_loss.1} parent=27 // pred_fallthru
          _
        %v222 = vld [vmem:[%s176] sm:$0xff]
        %v223 = vand.u32 2147483647, %v222
        %vm224 = vcmp.eq.f32.partialorder %v223, inf
        %v225 = vld [vmem:[%s185] sm:$0xff]
        %v226 = vld [vmem:[#allocation2] sm:$0xff]
        %227 = vmax.xlane.f32.xlu0 %v222
        %v228 = vpop.xlane.xlu0 %227
        %v229 = vmax.f32 %v226, %v228
        %v230 = vsub.f32 %v226, %v229
        %v231 = vmul.f32 %v230, 1.442695
        %v232 = vpow.pop %v231
        %234 = vset.pattern.permute.xlu0 0
        %235 = vperm.xlu0 %234, %v229
        %v236 = vpop.permute.xlu0 %235
        %v238 = vsub.f32 %v222, %v236
        %v239 = vmul.f32 %v238, 1.442695
        %v240 = vpow.pop %v239
        %v241 = vld [vmem:[#allocation3] sm:$0xff]
        %v242 = vmul.f32 %v232, %v241
        %243 = vadd.xlane.f32.xlu0 %v240
        %v244 = vpop.xlane.xlu0 %243
        %v245 = vadd.f32 %v242, %v244
        %vm246 = vcmask 7168
        %247 = vst.msk [vmem:[#allocation3] sm:$0xff] %vm246, %v245
        %v248 = vld [vmem:[#allocation4] sm:$0xff]
        %v249 = vmul.f32 %v232, %v248
        %v250 = vmul.f32 %v240, %v225
        %v251 = vsel %vm224, 0.0, %v250
        %252 = vadd.xlane.f32.xlu0 %v251
        %v253 = vpop.xlane.xlu0 %252
        %v254 = vadd.f32 %v249, %v253
        %255 = vst.msk [vmem:[#allocation4] sm:$0xff] %vm246, %v254
        %256 = vst.msk [vmem:[#allocation2] sm:$0xff] %vm246, %v229
        %v257 = vld [vmem:[#allocation5] sm:$0xff]
        %258 = vmax.xlane.f32.xlu0 %v225
        %v259 = vpop.xlane.xlu0 %258
        %v260 = vmax.f32 %v257, %v259
        %v261 = vsub.f32 %v257, %v260
        %v262 = vmul.f32 %v261, 1.442695
        %v263 = vpow.pop %v262
        %v264 = vld [vmem:[#allocation6] sm:$0xff]
        %v265 = vmul.f32 %v263, %v264
        %267 = vset.pattern.permute.xlu0 0
        %268 = vperm.xlu0 %267, %v260
        %v269 = vpop.permute.xlu0 %268
        %v271 = vsub.f32 %v225, %v269
        %v272 = vmul.f32 %v271, 1.442695
        %v273 = vpow.pop %v272
        %274 = vadd.xlane.f32.xlu0 %v273
        %v275 = vpop.xlane.xlu0 %274
        %v276 = vadd.f32 %v265, %v275
        %277 = vst.msk [vmem:[#allocation6] sm:$0xff] %vm246, %v276
        %278 = vst.msk [vmem:[#allocation5] sm:$0xff] %vm246, %v260
        // Predicated region
        $region41: #{kd_loss.1} parent=27 // pred_check
          %p279 = pneg %p212
        $region42: #{kd_loss.1} parent=27 // pred_check_branch
          %281 = sbr.rel (%p279) target = $region44
        $region43: #{kd_loss.1} parent=27 // pred_region
          %v282 = vld [vmem:[#allocation4] sm:$0xff]
          %v283 = vld [vmem:[#allocation3] sm:$0xff]
          %v284 = vrcp.pop %v283
          %v285 = vmul.f32 %v282, %v284
          %v286 = vld [vmem:[#allocation5] sm:$0xff]
          %v287 = vsub.f32 %v285, %v286
          %v288 = vld [vmem:[#allocation6] sm:$0xff]
          %v289 = vlog2.pop %v288
          %v290 = vmul.f32 %v289, 0.6931472
          %v291 = vsub.f32 %v287, %v290
          %v292 = vlaneseq
          %v293 = vshrl.u32 %v292, 7
          %v294 = vlaneseq
          %v295 = vand.u32 %v294, 127
          %vm296 = vcmp.eq.s32.totalorder %v293, %v295
          %298 = vset.pattern.permute.xlu0 0
          %299 = vperm.xlu0 %298, %v291
          %v300 = vpop.permute.xlu0 %299
          %v302 = vsel %vm296, %v300, 0.0
          %vm303 = vcmask 64512
          %v304 = vsel %vm303, %v302, 0.0
          %v305 = vrot.slane %v304, 4
          %v306 = vadd.f32 %v304, %v305
          %v307 = vrot.slane %v306, 2
          %v308 = vadd.f32 %v306, %v307
          %v309 = vrot.slane %v308, 1
          %v310 = vadd.f32 %v308, %v309
          %vm311 = vcmask 57344
          %312 = vst.msk [vmem:[%s211] sm:$0x1] %vm311, %v310
        $region44: #{kd_loss.1} parent=27 // pred_fallthru
          _
        %p313 = scmp.lt.s32.totalorder %s23, 1
        %s314 = scalar_select %p313, %s23, 1
        %s315 = scalar_lea.vmem %s2, %s314
        // Predicated region
        $region45: #{kd_loss.1} parent=27 // pred_check
          %p316 = pneg %p105
        $region46: #{kd_loss.1} parent=27 // pred_check_branch
          %318 = sbr.rel (%p316) target = $region48
        $region47: #{kd_loss.1} parent=27 // pred_region
          _
        $region48: #{kd_loss.1} parent=27 // pred_fallthru
          _
      $region28: #{kd_loss.1} parent=5 // pred_fallthru
        _
      %p319 = scmp.le.s32.totalorder 2, %s14
      // Predicated region
      $region49: #{kd_loss.1} parent=5 // pred_check
        %p320 = pneg %p319
      $region50: #{kd_loss.1} parent=5 // pred_check_branch
        %322 = sbr.rel (%p320) target = $region52
      $region51: #{kd_loss.1} parent=5 // pred_region
        %s323 = ssub.s32 %s14, 2
        // Predicated region
        $region53: #{kd_loss.1} parent=51 // pred_check
          %p324 = pneg %p111
        $region54: #{kd_loss.1} parent=51 // pred_check_branch
          %326 = sbr.rel (%p324) target = $region56
        $region55: #{kd_loss.1} parent=51 // pred_region
          %p327 = scmp.lt.s32.totalorder %s25, 1
          %s328 = scalar_select %p327, %s25, 1
          %s329 = scalar_lea.vmem %s2, %s328
        $region56: #{kd_loss.1} parent=51 // pred_fallthru
          _
      $region52: #{kd_loss.1} parent=5 // pred_fallthru
        _
    $region6: #{kd_loss.1} parent=1 // loop_footer
      %s18 = sadd.s32 1, %s14
    $region7: #{kd_loss.1} parent=1 // loop_footer_branch
      %13 = sbr.rel target = $region3
    $region8: #{kd_loss.1} parent=1 // loop_exit
      _
    %330 = vsyncpa [#allocation8], 1
    %s331 = scalar_lea.sflag [#allocation8], 1
    %332 = vsyncpa %s331, 1
    %333 = vsyncpa [#allocation10], 1
    %s334 = scalar_lea.sflag [#allocation10], 1
    %335 = vsyncpa %s334, 1

</llo_original>
